<compile_context>
chip_gen: v6e
topology: v6e:2x2x1
jax: 0.10.0
libtpu: 0.0.40
codegen_flags: <defaults>
</compile_context>

<pallas_src>
import functools

import jax
import jax.numpy as jnp
from jax.experimental import pallas as pl
from jax.experimental.pallas import tpu as pltpu


def _round_up(x, m):
    return ((x + m - 1) // m) * m


def _make_mlp_kernel(n_layers: int, d_in_r: int):
    """Kernel over one batch tile.

    Refs: x_ref (TM, d_in_r) f32, w_ref (L, Dp, Dp) f32/bf16, b_ref (L, 1, Dp) f32,
          o_ref (TM, Dp) f32.
    ReLU after every layer except the last (matches LazyMLP.forward).
    """

    def kernel(x_ref, w_ref, b_ref, o_ref):
        h = x_ref[...]                                   # f32 activations
        for i in range(n_layers):
            # Layer 0 only needs the first d_in_r rows of the padded slab.
            w_i = w_ref[0, :d_in_r, :] if i == 0 else w_ref[i]
            # Cast only the MXU operands (no-op when the weight slab is f32).
            lhs = h if h.dtype == w_ref.dtype else h.astype(w_ref.dtype)
            h = jnp.dot(lhs, w_i, preferred_element_type=jnp.float32) + b_ref[i]
            if i < n_layers - 1:
                h = jnp.maximum(h, 0.0)                  # activation = F.relu
                # TODO(synk): dropout_rate=0.0 -> identity; a nonzero rate would
                # need pltpu.prng_seed + pltpu.stateful_bernoulli masking here.
        o_ref[...] = h

    return kernel


def pack_params(flat_params, weight_dtype=jnp.bfloat16):
    """Pack (w0, b0, w1, b1, ...) into two lane-dense, zero-padded slabs.

    w_i: (K_i, N_i), b_i: (N_i,). Returns
      w_slab: (L, Dp, Dp) weight_dtype, b_slab: (L, 1, Dp) float32,
    with Dp = round_up(max(all dims), 128). Zero padding is exact: padded rows /
    columns contribute exactly 0 to every matmul and survive ReLU as 0.
    bf16 weights (default) halve the one-time weight DMA and resident VMEM on
    all generations; use jnp.float32 for bit-tight verification.
    """
    n_layers = len(flat_params) // 2
    dims = [flat_params[0].shape[0]] + [flat_params[2 * i].shape[1] for i in range(n_layers)]
    d_pad = _round_up(max(dims), 128)

    w_slab = jnp.zeros((n_layers, d_pad, d_pad), weight_dtype)
    b_slab = jnp.zeros((n_layers, 1, d_pad), jnp.float32)
    for i in range(n_layers):
        w = flat_params[2 * i]
        b = flat_params[2 * i + 1]
        w_slab = w_slab.at[i, : w.shape[0], : w.shape[1]].set(w.astype(weight_dtype))
        b_slab = b_slab.at[i, 0, : b.shape[0]].set(b.astype(jnp.float32))
    return w_slab, b_slab


@functools.partial(jax.jit, static_argnames=("out_features",))
def lazy_mlp_forward(x, w_slab, b_slab, *, out_features):
    """x: (B, D_in). w_slab: (L, Dp, Dp). b_slab: (L, 1, Dp). Returns (B, out_features) f32."""
    batch, d_in = x.shape
    n_layers, d_pad, _ = w_slab.shape

    # Feature dim stays native; only round up to the f32 sublane pack (8) when
    # needed. For d_in % 8 == 0 (e.g. 16) this is a no-op and x goes straight
    # into the kernel with zero extra HBM passes.
    d_in_r = _round_up(d_in, 8)
    if x.dtype != jnp.float32:
        x = x.astype(jnp.float32)
    if d_in_r != d_in:
        x = jnp.pad(x, ((0, 0), (0, d_in_r - d_in)))

    # Batch tile: >=2 tiles whenever batch >= 16 (so v7x's two TensorCores both
    # get work), capped at 512 rows for large batches (amortizes the ~0.35us
    # per-step overhead on single-TC v5e/v6e and keeps lane-dense vst runs long).
    if batch >= 16:
        tm = min(512, _round_up(pl.cdiv(batch, 2), 8))
    else:
        tm = _round_up(max(batch, 1), 8)
    grid_m = pl.cdiv(batch, tm)          # ragged last tile handled by Pallas

    kernel = _make_mlp_kernel(n_layers, d_in_r)

    # Advisory cost estimate (logical compute / bytes actually moved).
    itemsize_w = jnp.dtype(w_slab.dtype).itemsize
    flops = 2 * batch * (d_in_r * d_pad + (n_layers - 1) * d_pad * d_pad)
    bytes_accessed = (batch * d_in_r * 4 + w_slab.size * itemsize_w
                      + b_slab.size * 4 + batch * d_pad * 4)

    # VMEM budget: double-buffered x/out tiles + resident weight/bias slabs
    # (counted twice for the default double-buffer), with headroom, capped well
    # under v7x's 64 MiB physical ceiling.
    working_set = (2 * tm * (d_in_r + d_pad) * 4
                   + 2 * (w_slab.size * itemsize_w + b_slab.size * 4))
    vmem_limit = int(min(64 * 1024 * 1024, max(4 * 1024 * 1024, 2 * working_set)))

    out_p = pl.pallas_call(
        kernel,
        out_shape=jax.ShapeDtypeStruct((batch, d_pad), jnp.float32),
        grid=(grid_m,),
        in_specs=[
            # Batch-tiled activations at native feature width: new block per
            # grid step (double-buffered); last partial tile is ragged.
            pl.BlockSpec((tm, d_in_r), lambda i: (i, 0)),
            # Weights / biases: constant block index -> fetched once, resident.
            pl.BlockSpec((n_layers, d_pad, d_pad), lambda i: (0, 0, 0)),
            pl.BlockSpec((n_layers, 1, d_pad), lambda i: (0, 0, 0)),
        ],
        out_specs=pl.BlockSpec((tm, d_pad), lambda i: (i, 0)),
        compiler_params=pltpu.CompilerParams(
            dimension_semantics=("parallel",),   # shards batch tiles across TCs on v7x
            vmem_limit_bytes=vmem_limit,
        ),
        cost_estimate=pl.CostEstimate(
            flops=flops, transcendentals=0, bytes_accessed=bytes_accessed),
    )(x, w_slab, b_slab)

    # Only the lane slice remains (no row slice: batch was never padded).
    return out_p[:, :out_features]


def init_lazy_mlp_params(key, in_features, hidden_sizes, output_size):
    """nn.Linear-style init: U(-1/sqrt(fan_in), +1/sqrt(fan_in)). W stored (in, out)."""
    dims = [in_features] + list(hidden_sizes) + [output_size]
    params = []
    for i in range(len(dims) - 1):
        fan_in, fan_out = dims[i], dims[i + 1]
        key, kw, kb = jax.random.split(key, 3)
        bound = 1.0 / float(fan_in) ** 0.5
        w = jax.random.uniform(kw, (fan_in, fan_out), jnp.float32, -bound, bound)
        b = jax.random.uniform(kb, (fan_out,), jnp.float32, -bound, bound)
        params += [w, b]
    return params


def reference_mlp(x, flat_params):
    """Pure-JAX reference of LazyMLP.forward."""
    n_layers = len(flat_params) // 2
    h = x
    for i in range(n_layers):
        w, b = flat_params[2 * i], flat_params[2 * i + 1]
        h = h @ w + b
        if i < n_layers - 1:
            h = jnp.maximum(h, 0.0)
    return h


if __name__ == "__main__":
    # LazyMLP(hidden_sizes=[32, 32], output_size=8); LazyLinear infers in_features=16.
    in_features, hidden_sizes, output_size = 16, [32, 32], 8

    key = jax.random.PRNGKey(0)
    key, kx = jax.random.split(key)
    flat_params = init_lazy_mlp_params(key, in_features, hidden_sizes, output_size)

    # f32 slab for exact verification; bf16 slab is the default perf path
    # (MXU-native on all of v5e/v6e/v7x; bias add + ReLU stay f32).
    w32, b32 = pack_params(flat_params, jnp.float32)
    wbf, bbf = pack_params(flat_params)                  # bf16 weights (default)

    # Main case: batch 300 -> 2 ragged tiles of 152 rows (both v7x TCs busy).
    x = jax.random.normal(kx, (300, in_features), dtype=jnp.float32)
    ref = reference_mlp(x, flat_params)
    out = jax.block_until_ready(
        lazy_mlp_forward(x, w32, b32, out_features=output_size))
    assert out.shape == (300, output_size), out.shape
    assert jnp.allclose(out, ref, atol=1e-4, rtol=1e-4), "f32 mismatch vs reference"

    # Tiny-batch edge case (single ragged 8-row tile, grid of 1).
    x2 = jax.random.normal(jax.random.PRNGKey(1), (2, in_features), dtype=jnp.float32)
    out2 = jax.block_until_ready(
        lazy_mlp_forward(x2, w32, b32, out_features=output_size))
    ref2 = reference_mlp(x2, flat_params)
    assert out2.shape == (2, output_size), out2.shape
    assert jnp.allclose(out2, ref2, atol=1e-4, rtol=1e-4), "small-batch mismatch"

    # bf16-weight MXU path (default perf config): explicit low-precision mode,
    # activations are re-rounded to bf16 at each layer -> loose tolerance.
    outb = jax.block_until_ready(
        lazy_mlp_forward(x, wbf, bbf, out_features=output_size))
    assert outb.shape == (300, output_size), outb.shape
    assert jnp.allclose(outb, ref, atol=1e-1, rtol=1e-1), "bf16 path diverged"

    print("KERNEL_OK")
</pallas_src>

<mosaic_0001>
module attributes {stable_mosaic.version = 11 : i64} {
  func.func @kernel(%arg0: i32, %arg1: memref<152x16xf32, #tpu.memory_space<vmem>>, %arg2: memref<3x128x128xf32, #tpu.memory_space<vmem>>, %arg3: memref<3x1x128xf32, #tpu.memory_space<vmem>>, %arg4: memref<152x128xf32, #tpu.memory_space<vmem>>) attributes {dimension_semantics = [#tpu.dimension_semantics<parallel>], iteration_bounds = array<i64: 2>, scalar_prefetch = 0 : i64, scratch_operands = 0 : i64, tpu.core_type = #tpu.core_type<tc>, window_params = [{transform_indices = @transform_0, window_bounds = array<i64: 152, 16>}, {pipeline_mode = #tpu.pipeline_mode<synchronous>, transform_indices = @transform_1, window_bounds = array<i64: 3, 128, 128>}, {pipeline_mode = #tpu.pipeline_mode<synchronous>, transform_indices = @transform_2, window_bounds = array<i64: 3, 1, 128>}, {transform_indices = @transform_3, window_bounds = array<i64: 152, 128>}]} {
    %c0 = arith.constant 0 : index
    %c0_0 = arith.constant 0 : index
    %0 = vector.load %arg1[%c0, %c0_0] : memref<152x16xf32, #tpu.memory_space<vmem>>, vector<152x16xf32>
    %c0_1 = arith.constant 0 : index
    %c0_2 = arith.constant 0 : index
    %c0_3 = arith.constant 0 : index
    %1 = vector.load %arg2[%c0_1, %c0_2, %c0_3] : memref<3x128x128xf32, #tpu.memory_space<vmem>>, vector<1x16x128xf32>
    %2 = vector.shape_cast %1 : vector<1x16x128xf32> to vector<16x128xf32>
    %cst = arith.constant dense<0.000000e+00> : vector<152x128xf32>
    %3 = tpu.matmul %0, %2, %cst {dimension_numbers = #tpu.dot_dimension_numbers<[1], [0], [0], [1], [0, 0, 1, 1], [], []>} : vector<152x16xf32>, vector<16x128xf32>, vector<152x128xf32> -> vector<152x128xf32>
    %c0_4 = arith.constant 0 : index
    %c0_5 = arith.constant 0 : index
    %c0_6 = arith.constant 0 : index
    %4 = vector.load %arg3[%c0_4, %c0_5, %c0_6] : memref<3x1x128xf32, #tpu.memory_space<vmem>>, vector<1x1x128xf32>
    %5 = vector.shape_cast %4 : vector<1x1x128xf32> to vector<1x128xf32>
    %6 = vector.broadcast %5 : vector<1x128xf32> to vector<152x128xf32>
    %7 = arith.addf %3, %6 : vector<152x128xf32>
    %cst_7 = arith.constant 0.000000e+00 : f32
    %8 = vector.broadcast %cst_7 : f32 to vector<152x128xf32>
    %9 = arith.maximumf %7, %8 : vector<152x128xf32>
    %c1 = arith.constant 1 : index
    %c0_8 = arith.constant 0 : index
    %c0_9 = arith.constant 0 : index
    %10 = vector.load %arg2[%c1, %c0_8, %c0_9] : memref<3x128x128xf32, #tpu.memory_space<vmem>>, vector<1x128x128xf32>
    %11 = vector.shape_cast %10 : vector<1x128x128xf32> to vector<128x128xf32>
    %cst_10 = arith.constant dense<0.000000e+00> : vector<152x128xf32>
    %12 = tpu.matmul %9, %11, %cst_10 {dimension_numbers = #tpu.dot_dimension_numbers<[1], [0], [0], [1], [0, 0, 1, 1], [], []>} : vector<152x128xf32>, vector<128x128xf32>, vector<152x128xf32> -> vector<152x128xf32>
    %c1_11 = arith.constant 1 : index
    %c0_12 = arith.constant 0 : index
    %c0_13 = arith.constant 0 : index
    %13 = vector.load %arg3[%c1_11, %c0_12, %c0_13] : memref<3x1x128xf32, #tpu.memory_space<vmem>>, vector<1x1x128xf32>
    %14 = vector.shape_cast %13 : vector<1x1x128xf32> to vector<1x128xf32>
    %15 = vector.broadcast %14 : vector<1x128xf32> to vector<152x128xf32>
    %16 = arith.addf %12, %15 : vector<152x128xf32>
    %cst_14 = arith.constant 0.000000e+00 : f32
    %17 = vector.broadcast %cst_14 : f32 to vector<152x128xf32>
    %18 = arith.maximumf %16, %17 : vector<152x128xf32>
    %c2 = arith.constant 2 : index
    %c0_15 = arith.constant 0 : index
    %c0_16 = arith.constant 0 : index
    %19 = vector.load %arg2[%c2, %c0_15, %c0_16] : memref<3x128x128xf32, #tpu.memory_space<vmem>>, vector<1x128x128xf32>
    %20 = vector.shape_cast %19 : vector<1x128x128xf32> to vector<128x128xf32>
    %cst_17 = arith.constant dense<0.000000e+00> : vector<152x128xf32>
    %21 = tpu.matmul %18, %20, %cst_17 {dimension_numbers = #tpu.dot_dimension_numbers<[1], [0], [0], [1], [0, 0, 1, 1], [], []>} : vector<152x128xf32>, vector<128x128xf32>, vector<152x128xf32> -> vector<152x128xf32>
    %c2_18 = arith.constant 2 : index
    %c0_19 = arith.constant 0 : index
    %c0_20 = arith.constant 0 : index
    %22 = vector.load %arg3[%c2_18, %c0_19, %c0_20] : memref<3x1x128xf32, #tpu.memory_space<vmem>>, vector<1x1x128xf32>
    %23 = vector.shape_cast %22 : vector<1x1x128xf32> to vector<1x128xf32>
    %24 = vector.broadcast %23 : vector<1x128xf32> to vector<152x128xf32>
    %25 = arith.addf %21, %24 : vector<152x128xf32>
    %c0_21 = arith.constant 0 : index
    %c0_22 = arith.constant 0 : index
    %26 = vector.load %arg4[%c0_21, %c0_22] : memref<152x128xf32, #tpu.memory_space<vmem>>, vector<152x128xf32>
    tpu.vector_store %arg4[%c0_21, %c0_22], %25 {strides = array<i32>} : memref<152x128xf32, #tpu.memory_space<vmem>>, vector<152x128xf32>,
    return
  }
  func.func @transform_0(%arg0: i32) -> (i32, i32) {
    %c0_i32 = arith.constant 0 : i32
    %c0_i32_0 = arith.constant 0 : i32
    return %arg0, %c0_i32 : i32, i32
  }
  func.func @transform_1(%arg0: i32) -> (i32, i32, i32) {
    %c0_i32 = arith.constant 0 : i32
    %c0_i32_0 = arith.constant 0 : i32
    %c0_i32_1 = arith.constant 0 : i32
    %c0_i32_2 = arith.constant 0 : i32
    return %c0_i32, %c0_i32_0, %c0_i32_1 : i32, i32, i32
  }
  func.func @transform_2(%arg0: i32) -> (i32, i32, i32) {
    %c0_i32 = arith.constant 0 : i32
    %c0_i32_0 = arith.constant 0 : i32
    %c0_i32_1 = arith.constant 0 : i32
    %c0_i32_2 = arith.constant 0 : i32
    return %c0_i32, %c0_i32_0, %c0_i32_1 : i32, i32, i32
  }
  func.func @transform_3(%arg0: i32) -> (i32, i32) {
    %c0_i32 = arith.constant 0 : i32
    %c0_i32_0 = arith.constant 0 : i32
    return %arg0, %c0_i32 : i32, i32
  }
}

</mosaic_0001>

<llo_original>
// kernel: lazy_mlp_forward.1
$region0: #{lazy_mlp_forward.1}
  #allocation0 [shape = 'u32[]', space=smem, size = 0x4, offset = 0x4, fixed_abs, tag = 'smem constant byte address 0x4 - core index']
  #allocation1 [shape = 'u32[144,128]{1,0:T(1,128)}', space=vmem, size = 0x12000, scoped, tag = 'internal scratch']
  %s0 = inlined_call_operand.vmem [shape: f32[300,16], index: 0, kind: input, shape index: {}]
  %s1 = inlined_call_operand.hbm [shape: f32[3,128,128], index: 1, kind: input, shape index: {}]
  %s2 = inlined_call_operand.vmem [shape: f32[3,1,128], index: 2, kind: input, shape index: {}]
  %s3 = inlined_call_operand.vmem [shape: f32[300,128], index: 3, kind: output, shape index: {}]
  %s4 = sld [smem:[#allocation0]]
  $region49: #{lazy_mlp_forward.1} parent=0
    _
  %s6 = ssub.s32 1, %s4
  %s7 = scalar_select 0, %s6, %s4
  $region1: #{lazy_mlp_forward.1} parent=0
    #allocation2 [shape = 'u8[196608]{0}', space=vmem, size = 0x30000, scoped, tag = 'input window, operand 1, single buffered']
    #allocation3 [shape = 's32[2]{0}', space=sflag, size = 0x8, scoped, tag = 'scoped memory for lazy_mlp_forward.1']
    %8 = vsyncpa [#allocation3], 0
    loop: start=0, step=1, limit=4
    $region2: #{lazy_mlp_forward.1} parent=1 // loop_pre_header
      _
    $region3: #{lazy_mlp_forward.1} parent=1 // loop_header
      %s10 = sphi 0, %s14
      %p11 = scmp.ge.s32.totalorder %s10, 4
      %s20 = sphi 0, %s22
      %s23 = sphi 0, %s20
      %s24 = sphi 0, %s23
      %s40 = sphi 0, %s24
      %s44 = sphi 0, %s44
      %s46 = sphi 0, %s44
      %s47 = sphi 0, %s46
      %s61 = sphi 0, %s47
      %s65 = sphi 0, %s65
      %s67 = sphi 0, %s65
      %s68 = sphi 0, %s67
      %s82 = sphi 0, %s68
      %s88 = sphi 0, %s90
      %s91 = sphi 0, %s88
      %s92 = sphi 0, %s91
      %s108 = sphi 0, %s92
    $region4: #{lazy_mlp_forward.1} parent=1 // loop_header_branch
      %13 = sbr.rel (%p11) target = $region8
    $region5: #{lazy_mlp_forward.1} parent=1 // loop_body
      %s15 = ssub.s32 %s10, 1
      %s16 = ssub.s32 %s10, 2
      %s17 = sadd.s32 %s10, 1
      %s18 = ssub.s32 %s10, %s17
      %p19 = scmp.eq.s32.totalorder %s18, 0
      %s21 = sadd.s32 %s20, 1
      %s22 = scalar_select %p19, %s20, %s21
      %p25 = pneg %p19
      %p26 = scmp.eq.s32.totalorder %s10, 1
      %p27 = por %p25, %p26
      %p28 = scmp.ne.s32.totalorder %s20, %s23
      %p29 = scmp.eq.s32.totalorder %s10, 0
      %p30 = por %p28, %p29
      %p31 = scmp.ne.s32.totalorder %s20, %s23
      %p32 = scmp.eq.s32.totalorder %s15, 1
      %p33 = por %p31, %p32
      %p34 = scmp.ne.s32.totalorder %s23, %s24
      %p35 = scmp.eq.s32.totalorder %s15, 0
      %p36 = por %p34, %p35
      %p37 = scmp.ne.s32.totalorder %s23, %s24
      %p38 = scmp.eq.s32.totalorder %s16, 1
      %p39 = por %p37, %p38
      %p41 = scmp.ne.s32.totalorder %s24, %s40
      %p42 = scmp.eq.s32.totalorder %s16, 0
      %p43 = por %p41, %p42
      %s45 = sadd.s32 %s44, 1
      %p48 = scmp.eq.s32.totalorder %s10, 1
      %p49 = scmp.ne.s32.totalorder %s44, %s46
      %p50 = scmp.eq.s32.totalorder %s10, 0
      %p51 = por %p49, %p50
      %p52 = scmp.ne.s32.totalorder %s44, %s46
      %p53 = scmp.eq.s32.totalorder %s15, 1
      %p54 = por %p52, %p53
      %p55 = scmp.ne.s32.totalorder %s46, %s47
      %p56 = scmp.eq.s32.totalorder %s15, 0
      %p57 = por %p55, %p56
      %p58 = scmp.ne.s32.totalorder %s46, %s47
      %p59 = scmp.eq.s32.totalorder %s16, 1
      %p60 = por %p58, %p59
      %p62 = scmp.ne.s32.totalorder %s47, %s61
      %p63 = scmp.eq.s32.totalorder %s16, 0
      %p64 = por %p62, %p63
      %s66 = sadd.s32 %s65, 1
      %p69 = scmp.eq.s32.totalorder %s10, 1
      %p70 = scmp.ne.s32.totalorder %s65, %s67
      %p71 = scmp.eq.s32.totalorder %s10, 0
      %p72 = por %p70, %p71
      %p73 = scmp.ne.s32.totalorder %s65, %s67
      %p74 = scmp.eq.s32.totalorder %s15, 1
      %p75 = por %p73, %p74
      %p76 = scmp.ne.s32.totalorder %s67, %s68
      %p77 = scmp.eq.s32.totalorder %s15, 0
      %p78 = por %p76, %p77
      %p79 = scmp.ne.s32.totalorder %s67, %s68
      %p80 = scmp.eq.s32.totalorder %s16, 1
      %p81 = por %p79, %p80
      %p83 = scmp.ne.s32.totalorder %s68, %s82
      %p84 = scmp.eq.s32.totalorder %s16, 0
      %p85 = por %p83, %p84
      %s86 = ssub.s32 %s10, %s17
      %p87 = scmp.eq.s32.totalorder %s86, 0
      %s89 = sadd.s32 %s88, 1
      %s90 = scalar_select %p87, %s88, %s89
      %p93 = pneg %p87
      %p94 = scmp.eq.s32.totalorder %s10, 1
      %p95 = por %p93, %p94
      %p96 = scmp.ne.s32.totalorder %s88, %s91
      %p97 = scmp.eq.s32.totalorder %s10, 0
      %p98 = por %p96, %p97
      %p99 = scmp.ne.s32.totalorder %s88, %s91
      %p100 = scmp.eq.s32.totalorder %s15, 1
      %p101 = por %p99, %p100
      %p102 = scmp.ne.s32.totalorder %s91, %s92
      %p103 = scmp.eq.s32.totalorder %s15, 0
      %p104 = por %p102, %p103
      %p105 = scmp.ne.s32.totalorder %s91, %s92
      %p106 = scmp.eq.s32.totalorder %s16, 1
      %p107 = por %p105, %p106
      %p109 = scmp.ne.s32.totalorder %s92, %s108
      %p110 = scmp.eq.s32.totalorder %s16, 0
      %p111 = por %p109, %p110
      %p112 = scmp.le.s32.totalorder 1, %s10
      %p113 = scmp.lt.s32.totalorder %s10, 3
      %p114 = pnand %p112, %p113
      %p115 = pneg %p114
      // Predicated region
      $region9: #{lazy_mlp_forward.1} parent=5 // pred_check
        _
      $region10: #{lazy_mlp_forward.1} parent=5 // pred_check_branch
        %117 = sbr.rel (%p114) target = $region12
      $region11: #{lazy_mlp_forward.1} parent=5 // pred_region
        %s118 = ssub.s32 %s10, 1
        // Predicated region
        $region13: #{lazy_mlp_forward.1} parent=11 // pred_check
          %p119 = pneg %p57
        $region14: #{lazy_mlp_forward.1} parent=11 // pred_check_branch
          %121 = sbr.rel (%p119) target = $region16
        $region15: #{lazy_mlp_forward.1} parent=11 // pred_region
          %s123 = ssub.s32 6144, 6144
          %124 = vsyncadd [#allocation3], %s123
          %s125 = sshll.u32 [#allocation2], 4
          %s126 = int_to_ptr.vmem [resolvable:$true] %s125
          %131 = dma.hbm_to_vmem [thread:$0]  %s1, 6144, %s126, [#allocation3], 128, 128, 8
        $region16: #{lazy_mlp_forward.1} parent=11 // pred_fallthru
          _
        // Predicated region
        $region17: #{lazy_mlp_forward.1} parent=11 // pred_check
          %p132 = pneg %p78
        $region18: #{lazy_mlp_forward.1} parent=11 // pred_check_branch
          %134 = sbr.rel (%p132) target = $region20
        $region19: #{lazy_mlp_forward.1} parent=11 // pred_region
          _
        $region20: #{lazy_mlp_forward.1} parent=11 // pred_fallthru
          _
      $region12: #{lazy_mlp_forward.1} parent=5 // pred_fallthru
        _
      %p135 = scmp.lt.s32.totalorder %s10, 2
      // Predicated region
      $region21: #{lazy_mlp_forward.1} parent=5 // pred_check
        %p136 = pneg %p135
      $region22: #{lazy_mlp_forward.1} parent=5 // pred_check_branch
        %138 = sbr.rel (%p136) target = $region24
      $region23: #{lazy_mlp_forward.1} parent=5 // pred_region
        // Predicated region
        $region25: #{lazy_mlp_forward.1} parent=23 // pred_check
          %p139 = pneg %p30
        $region26: #{lazy_mlp_forward.1} parent=23 // pred_check_branch
          %141 = sbr.rel (%p139) target = $region28
        $region27: #{lazy_mlp_forward.1} parent=23 // pred_region
          %s142 = smul.u32 19, %s10
          %p143 = scmp.lt.s32.totalorder %s142, 37
          %s144 = scalar_select %p143, %s142, 37
          %s145 = smul.addr %s144, 8
          %s146 = scalar_lea.vmem %s0, %s145
          %s147 = smul.u32 19, %s10
        $region28: #{lazy_mlp_forward.1} parent=23 // pred_fallthru
          _
      $region24: #{lazy_mlp_forward.1} parent=5 // pred_fallthru
        _
      %p148 = scmp.le.s32.totalorder 1, %s10
      %p149 = scmp.lt.s32.totalorder %s10, 3
      %p150 = pnand %p148, %p149
      %p151 = pneg %p150
      // Predicated region
      $region29: #{lazy_mlp_forward.1} parent=5 // pred_check
        _
      $region30: #{lazy_mlp_forward.1} parent=5 // pred_check_branch
        %153 = sbr.rel (%p150) target = $region32
      $region31: #{lazy_mlp_forward.1} parent=5 // pred_region
        %s154 = ssub.s32 %s10, 1
        // Predicated region
        $region33: #{lazy_mlp_forward.1} parent=31 // pred_check
          %p155 = pneg %p57
        $region34: #{lazy_mlp_forward.1} parent=31 // pred_check_branch
          %157 = sbr.rel (%p155) target = $region36
        $region35: #{lazy_mlp_forward.1} parent=31 // pred_region
          %158 = dma.done [#allocation3], 6144
        $region36: #{lazy_mlp_forward.1} parent=31 // pred_fallthru
          _
        %s159 = smul.u32 19, %s15
        %p160 = scmp.lt.s32.totalorder %s159, 37
        %s161 = scalar_select %p160, %s159, 37
        %s162 = smul.addr %s161, 8
        %s163 = scalar_lea.vmem %s0, %s162
        %p164 = pneg %p36
        %p165 = pneg %p33
        %p166 = pneg %p57
        %p167 = pneg %p54
        %p168 = pneg %p78
        %p169 = pneg %p75
        %p170 = pneg %p104
        %p171 = pneg %p101
        %s172 = smul.u32 19, %s15
        %p173 = scmp.lt.s32.totalorder %s172, 37
        %s174 = scalar_select %p173, %s172, 37
        %s175 = smul.addr %s174, 8
        %s176 = scalar_lea.vmem %s3, %s175
        %s177 = smul.u32 19, %s15
        %p178 = scmp.lt.s32.totalorder %s177, 37
        %s179 = scalar_select %p178, %s177, 37
        %s180 = smul.addr %s179, 8
        %s181 = scalar_lea.vmem %s0, %s180
        %s182 = smul.u32 19, %s15
        %s183 = smul.u32 19, %s15
        %p184 = scmp.lt.s32.totalorder %s183, 37
        %s185 = scalar_select %p184, %s183, 37
        %s186 = smul.addr %s185, 8
        %s187 = scalar_lea.vmem %s3, %s186
        %s188 = smul.u32 19, %s15
        %v189 = vld [vmem:[%s181] sm:$0xff]
        %v190 = vld [vmem:[%s181 + $0x8] sm:$0xff]
        %v191 = vld [vmem:[%s181 + $0x10] sm:$0xff]
        %v192 = vld [vmem:[%s181 + $0x18] sm:$0xff]
        %v193 = vld [vmem:[%s181 + $0x20] sm:$0xff]
        %v194 = vld [vmem:[%s181 + $0x28] sm:$0xff]
        %v195 = vld [vmem:[%s181 + $0x30] sm:$0xff]
        %v196 = vld [vmem:[%s181 + $0x38] sm:$0xff]
        %v197 = vld [vmem:[%s181 + $0x40] sm:$0xff]
        %v198 = vld [vmem:[%s181 + $0x48] sm:$0xff]
        %v199 = vld [vmem:[%s181 + $0x50] sm:$0xff]
        %v200 = vld [vmem:[%s181 + $0x58] sm:$0xff]
        %v201 = vld [vmem:[%s181 + $0x60] sm:$0xff]
        %v202 = vld [vmem:[%s181 + $0x68] sm:$0xff]
        %v203 = vld [vmem:[%s181 + $0x70] sm:$0xff]
        %v204 = vld [vmem:[%s181 + $0x78] sm:$0xff]
        %v205 = vld [vmem:[%s181 + $0x80] sm:$0xff]
        %v206 = vld [vmem:[%s181 + $0x88] sm:$0xff]
        %v207 = vld [vmem:[%s181 + $0x90] sm:$0xff]
        %v208 = vld [vmem:[#allocation2] sm:$0xff]
        %v209 = vld [vmem:[#allocation2 + $0x8] sm:$0xff]
        %v210 = vld [vmem:[%s2] sm:$0x1]
        %v212 = vlaneseq
        %v213 = vshrl.u32 %v212, 7
        %v214 = vsub.s32 0, %v213
        %v215 = vrot.slane %v210, %v214
        %vm217 = vcmask 130048
        %v219 = vsel %vm217, %v189, 0
        %v222 = vsel %vm217, %v190, 0
        %v225 = vsel %vm217, %v191, 0
        %v228 = vsel %vm217, %v192, 0
        %v231 = vsel %vm217, %v193, 0
        %v234 = vsel %vm217, %v194, 0
        %v237 = vsel %vm217, %v195, 0
        %v240 = vsel %vm217, %v196, 0
        %v243 = vsel %vm217, %v197, 0
        %v246 = vsel %vm217, %v198, 0
        %v249 = vsel %vm217, %v199, 0
        %v252 = vsel %vm217, %v200, 0
        %v255 = vsel %vm217, %v201, 0
        %v258 = vsel %vm217, %v202, 0
        %v261 = vsel %vm217, %v203, 0
        %v264 = vsel %vm217, %v204, 0
        %v267 = vsel %vm217, %v205, 0
        %v270 = vsel %vm217, %v206, 0
        %v273 = vsel %vm217, %v207, 0
        %275 = vmatprep.subr.mxu0 0.0
        %276 = vmatpush1.msra.mxu0 0.0
        %277 = vmatprep.subr.mxu0 0.0
        %278 = vmatpush1.msra.mxu0 0.0
        %279 = vmatprep.subr.mxu0 0.0
        %280 = vmatpush1.msra.mxu0 0.0
        %281 = vmatprep.subr.mxu0 0.0
        %282 = vmatpush1.msra.mxu0 0.0
        %283 = vmatprep.subr.mxu0 0.0
        %284 = vmatpush1.msra.mxu0 0.0
        %285 = vmatprep.subr.mxu0 0.0
        %286 = vmatpush1.msra.mxu0 0.0
        %287 = vmatprep.subr.mxu0 0.0
        %288 = vmatpush1.msra.mxu0 0.0
        %289 = vmatprep.subr.mxu0 0.0
        %290 = vmatpush1.msra.mxu0 0.0
        %291 = vmatprep.subr.mxu0 0.0
        %292 = vmatpush1.msra.mxu0 0.0
        %293 = vmatprep.subr.mxu0 0.0
        %294 = vmatpush1.msra.mxu0 0.0
        %295 = vmatprep.subr.mxu0 0.0
        %296 = vmatpush1.msra.mxu0 0.0
        %297 = vmatprep.subr.mxu0 0.0
        %298 = vmatpush1.msra.mxu0 0.0
        %299 = vmatprep.subr.mxu0 0.0
        %300 = vmatpush1.msra.mxu0 0.0
        %301 = vmatprep.subr.mxu0 0.0
        %302 = vmatpush1.msra.mxu0 0.0
        %303 = vmatprep.subr.mxu0 0.0
        %304 = vmatpush1.msra.mxu0 %v209
        %305 = vmatprep.subr.mxu0 0.0
        %306 = vmatpush1.msra.mxu0 %v208
        %307 = vmatprep.subr.mxu0 0.0
        %308 = vmatpush2.msra.mxu0 0.0
        %309 = vmatprep.subr.mxu0 0.0
        %310 = vmatpush2.msra.mxu0 0.0
        %311 = vmatprep.subr.mxu0 0.0
        %312 = vmatpush2.msra.mxu0 0.0
        %313 = vmatprep.subr.mxu0 0.0
        %314 = vmatpush2.msra.mxu0 0.0
        %315 = vmatprep.subr.mxu0 0.0
        %316 = vmatpush2.msra.mxu0 0.0
        %317 = vmatprep.subr.mxu0 0.0
        %318 = vmatpush2.msra.mxu0 0.0
        %319 = vmatprep.subr.mxu0 0.0
        %320 = vmatpush2.msra.mxu0 0.0
        %321 = vmatprep.subr.mxu0 0.0
        %322 = vmatpush2.msra.mxu0 0.0
        %323 = vmatprep.subr.mxu0 0.0
        %324 = vmatpush2.msra.mxu0 0.0
        %325 = vmatprep.subr.mxu0 0.0
        %326 = vmatpush2.msra.mxu0 0.0
        %327 = vmatprep.subr.mxu0 0.0
        %328 = vmatpush2.msra.mxu0 0.0
        %329 = vmatprep.subr.mxu0 0.0
        %330 = vmatpush2.msra.mxu0 0.0
        %331 = vmatprep.subr.mxu0 0.0
        %332 = vmatpush2.msra.mxu0 0.0
        %333 = vmatprep.subr.mxu0 0.0
        %334 = vmatpush2.msra.mxu0 0.0
        %335 = vmatprep.subr.mxu0 0.0
        %336 = vmatpush2.msra.mxu0 0.0
        %337 = vmatprep.subr.mxu0 0.0
        %338 = vmatpush2.msra.mxu0 0.0
        %339 = vmatprep.mubr.f32.mxu0 0.0
        %340 = vmatmul.mubr.f32.gmra.mxu0 %v219
        %v341 = vpop.f32.mrf.mxu0
        %v342 = vadd.f32 %v215, %v341
        %v343 = vpop.f32.mrf.mxu0
        %344 = vmatprep.mubr.f32.mxu0 0.0
        %345 = vmatmul.mubr.f32.gmra.mxu0 %v222
        %v346 = vpop.f32.mrf.mxu0
        %v347 = vadd.f32 %v215, %v346
        %v348 = vpop.f32.mrf.mxu0
        %349 = vmatprep.mubr.f32.mxu0 0.0
        %350 = vmatmul.mubr.f32.gmra.mxu0 %v225
        %v351 = vpop.f32.mrf.mxu0
        %v352 = vadd.f32 %v215, %v351
        %v353 = vpop.f32.mrf.mxu0
        %354 = vmatprep.mubr.f32.mxu0 0.0
        %355 = vmatmul.mubr.f32.gmra.mxu0 %v228
        %v356 = vpop.f32.mrf.mxu0
        %v357 = vadd.f32 %v215, %v356
        %v358 = vpop.f32.mrf.mxu0
        %359 = vmatprep.mubr.f32.mxu0 0.0
        %360 = vmatmul.mubr.f32.gmra.mxu0 %v231
        %v361 = vpop.f32.mrf.mxu0
        %v362 = vadd.f32 %v215, %v361
        %v363 = vpop.f32.mrf.mxu0
        %364 = vmatprep.mubr.f32.mxu0 0.0
        %365 = vmatmul.mubr.f32.gmra.mxu0 %v234
        %v366 = vpop.f32.mrf.mxu0
        %v367 = vadd.f32 %v215, %v366
        %v368 = vpop.f32.mrf.mxu0
        %369 = vmatprep.mubr.f32.mxu0 0.0
        %370 = vmatmul.mubr.f32.gmra.mxu0 %v237
        %v371 = vpop.f32.mrf.mxu0
        %v372 = vadd.f32 %v215, %v371
        %v373 = vpop.f32.mrf.mxu0
        %374 = vmatprep.mubr.f32.mxu0 0.0
        %375 = vmatmul.mubr.f32.gmra.mxu0 %v240
        %v376 = vpop.f32.mrf.mxu0
        %v377 = vadd.f32 %v215, %v376
        %v378 = vpop.f32.mrf.mxu0
        %379 = vmatprep.mubr.f32.mxu0 0.0
        %380 = vmatmul.mubr.f32.gmra.mxu0 %v243
        %v381 = vpop.f32.mrf.mxu0
        %v382 = vadd.f32 %v215, %v381
        %v383 = vpop.f32.mrf.mxu0
        %384 = vmatprep.mubr.f32.mxu0 0.0
        %385 = vmatmul.mubr.f32.gmra.mxu0 %v246
        %v386 = vpop.f32.mrf.mxu0
        %v387 = vadd.f32 %v215, %v386
        %v388 = vpop.f32.mrf.mxu0
        %389 = vmatprep.mubr.f32.mxu0 0.0
        %390 = vmatmul.mubr.f32.gmra.mxu0 %v249
        %v391 = vpop.f32.mrf.mxu0
        %v392 = vadd.f32 %v215, %v391
        %v393 = vpop.f32.mrf.mxu0
        %394 = vmatprep.mubr.f32.mxu0 0.0
        %395 = vmatmul.mubr.f32.gmra.mxu0 %v252
        %v396 = vpop.f32.mrf.mxu0
        %v397 = vadd.f32 %v215, %v396
        %v398 = vpop.f32.mrf.mxu0
        %399 = vmatprep.mubr.f32.mxu0 0.0
        %400 = vmatmul.mubr.f32.gmra.mxu0 %v255
        %v401 = vpop.f32.mrf.mxu0
        %v402 = vadd.f32 %v215, %v401
        %v403 = vpop.f32.mrf.mxu0
        %404 = vmatprep.mubr.f32.mxu0 0.0
        %405 = vmatmul.mubr.f32.gmra.mxu0 %v258
        %v406 = vpop.f32.mrf.mxu0
        %v407 = vadd.f32 %v215, %v406
        %v408 = vpop.f32.mrf.mxu0
        %409 = vmatprep.mubr.f32.mxu0 0.0
        %410 = vmatmul.mubr.f32.gmra.mxu0 %v261
        %v411 = vpop.f32.mrf.mxu0
        %v412 = vadd.f32 %v215, %v411
        %v413 = vpop.f32.mrf.mxu0
        %414 = vmatprep.mubr.f32.mxu0 0.0
        %415 = vmatmul.mubr.f32.gmra.mxu0 %v264
        %v416 = vpop.f32.mrf.mxu0
        %v417 = vadd.f32 %v215, %v416
        %v418 = vpop.f32.mrf.mxu0
        %419 = vmatprep.mubr.f32.mxu0 0.0
        %420 = vmatmul.mubr.f32.gmra.mxu0 %v267
        %v421 = vpop.f32.mrf.mxu0
        %v422 = vadd.f32 %v215, %v421
        %v423 = vpop.f32.mrf.mxu0
        %424 = vmatprep.mubr.f32.mxu0 0.0
        %425 = vmatmul.mubr.f32.gmra.mxu0 %v270
        %v426 = vpop.f32.mrf.mxu0
        %v427 = vadd.f32 %v215, %v426
        %v428 = vpop.f32.mrf.mxu0
        %429 = vmatprep.mubr.f32.mxu0 0.0
        %430 = vmatmul.mubr.f32.gmra.mxu0 %v273
        %v431 = vpop.f32.mrf.mxu0
        %v432 = vadd.f32 %v215, %v431
        %v433 = vpop.f32.mrf.mxu0
        %434 = vdwg.mxu0
        %v435 = vmax.f32 %v342, 0.0
        %v436 = vmax.f32 %v347, 0.0
        %v437 = vmax.f32 %v352, 0.0
        %v438 = vmax.f32 %v357, 0.0
        %v439 = vmax.f32 %v362, 0.0
        %v440 = vmax.f32 %v367, 0.0
        %v441 = vmax.f32 %v372, 0.0
        %v442 = vmax.f32 %v377, 0.0
        %v443 = vmax.f32 %v382, 0.0
        %v444 = vmax.f32 %v387, 0.0
        %v445 = vmax.f32 %v392, 0.0
        %v446 = vmax.f32 %v397, 0.0
        %v447 = vmax.f32 %v402, 0.0
        %v448 = vmax.f32 %v407, 0.0
        %v449 = vmax.f32 %v412, 0.0
        %v450 = vmax.f32 %v417, 0.0
        %v451 = vmax.f32 %v422, 0.0
        %v452 = vmax.f32 %v427, 0.0
        %v453 = vmax.f32 %v432, 0.0
        %s454 = scalar_lea.vmem [#allocation2], 128
        %v455 = vld [vmem:[%s454] sm:$0xff]
        %v456 = vld [vmem:[%s454 + $0x8] sm:$0xff]
        %v457 = vld [vmem:[%s454 + $0x10] sm:$0xff]
        %v458 = vld [vmem:[%s454 + $0x18] sm:$0xff]
        %v459 = vld [vmem:[%s454 + $0x20] sm:$0xff]
        %v460 = vld [vmem:[%s454 + $0x28] sm:$0xff]
        %v461 = vld [vmem:[%s454 + $0x30] sm:$0xff]
        %v462 = vld [vmem:[%s454 + $0x38] sm:$0xff]
        %v463 = vld [vmem:[%s454 + $0x40] sm:$0xff]
        %v464 = vld [vmem:[%s454 + $0x48] sm:$0xff]
        %v465 = vld [vmem:[%s454 + $0x50] sm:$0xff]
        %v466 = vld [vmem:[%s454 + $0x58] sm:$0xff]
        %v467 = vld [vmem:[%s454 + $0x60] sm:$0xff]
        %v468 = vld [vmem:[%s454 + $0x68] sm:$0xff]
        %v469 = vld [vmem:[%s454 + $0x70] sm:$0xff]
        %v470 = vld [vmem:[%s454 + $0x78] sm:$0xff]
        %s471 = scalar_lea.vmem %s2, 1
        %v472 = vld [vmem:[%s471] sm:$0x1]
        %v474 = vlaneseq
        %v475 = vshrl.u32 %v474, 7
        %v476 = vsub.s32 0, %v475
        %v477 = vrot.slane %v472, %v476
        %479 = vmatprep.subr.mxu0 0.0
        %480 = vmatpush1.msra.mxu0 %v470
        %481 = vmatprep.subr.mxu0 0.0
        %482 = vmatpush1.msra.mxu0 %v469
        %483 = vmatprep.subr.mxu0 0.0
        %484 = vmatpush1.msra.mxu0 %v468
        %485 = vmatprep.subr.mxu0 0.0
        %486 = vmatpush1.msra.mxu0 %v467
        %487 = vmatprep.subr.mxu0 0.0
        %488 = vmatpush1.msra.mxu0 %v466
        %489 = vmatprep.subr.mxu0 0.0
        %490 = vmatpush1.msra.mxu0 %v465
        %491 = vmatprep.subr.mxu0 0.0
        %492 = vmatpush1.msra.mxu0 %v464
        %493 = vmatprep.subr.mxu0 0.0
        %494 = vmatpush1.msra.mxu0 %v463
        %495 = vmatprep.subr.mxu0 0.0
        %496 = vmatpush1.msra.mxu0 %v462
        %497 = vmatprep.subr.mxu0 0.0
        %498 = vmatpush1.msra.mxu0 %v461
        %499 = vmatprep.subr.mxu0 0.0
        %500 = vmatpush1.msra.mxu0 %v460
        %501 = vmatprep.subr.mxu0 0.0
        %502 = vmatpush1.msra.mxu0 %v459
        %503 = vmatprep.subr.mxu0 0.0
        %504 = vmatpush1.msra.mxu0 %v458
        %505 = vmatprep.subr.mxu0 0.0
        %506 = vmatpush1.msra.mxu0 %v457
        %507 = vmatprep.subr.mxu0 0.0
        %508 = vmatpush1.msra.mxu0 %v456
        %509 = vmatprep.subr.mxu0 0.0
        %510 = vmatpush1.msra.mxu0 %v455
        %511 = vmatprep.subr.mxu0 0.0
        %512 = vmatpush2.msra.mxu0 0.0
        %513 = vmatprep.subr.mxu0 0.0
        %514 = vmatpush2.msra.mxu0 0.0
        %515 = vmatprep.subr.mxu0 0.0
        %516 = vmatpush2.msra.mxu0 0.0
        %517 = vmatprep.subr.mxu0 0.0
        %518 = vmatpush2.msra.mxu0 0.0
        %519 = vmatprep.subr.mxu0 0.0
        %520 = vmatpush2.msra.mxu0 0.0
        %521 = vmatprep.subr.mxu0 0.0
        %522 = vmatpush2.msra.mxu0 0.0
        %523 = vmatprep.subr.mxu0 0.0
        %524 = vmatpush2.msra.mxu0 0.0
        %525 = vmatprep.subr.mxu0 0.0
        %526 = vmatpush2.msra.mxu0 0.0
        %527 = vmatprep.subr.mxu0 0.0
        %528 = vmatpush2.msra.mxu0 0.0
        %529 = vmatprep.subr.mxu0 0.0
        %530 = vmatpush2.msra.mxu0 0.0
        %531 = vmatprep.subr.mxu0 0.0
        %532 = vmatpush2.msra.mxu0 0.0
        %533 = vmatprep.subr.mxu0 0.0
        %534 = vmatpush2.msra.mxu0 0.0
        %535 = vmatprep.subr.mxu0 0.0
        %536 = vmatpush2.msra.mxu0 0.0
        %537 = vmatprep.subr.mxu0 0.0
        %538 = vmatpush2.msra.mxu0 0.0
        %539 = vmatprep.subr.mxu0 0.0
        %540 = vmatpush2.msra.mxu0 0.0
        %541 = vmatprep.subr.mxu0 0.0
        %542 = vmatpush2.msra.mxu0 0.0
        %543 = vmatprep.mubr.f32.mxu0 0.0
        %544 = vmatmul.mubr.f32.gmra.mxu0 %v435
        %v545 = vpop.f32.mrf.mxu0
        %v546 = vadd.f32 %v477, %v545
        %v547 = vpop.f32.mrf.mxu0
        %548 = vmatprep.mubr.f32.mxu0 0.0
        %549 = vmatmul.mubr.f32.gmra.mxu0 %v436
        %v550 = vpop.f32.mrf.mxu0
        %v551 = vadd.f32 %v477, %v550
        %v552 = vpop.f32.mrf.mxu0
        %553 = vmatprep.mubr.f32.mxu0 0.0
        %554 = vmatmul.mubr.f32.gmra.mxu0 %v437
        %v555 = vpop.f32.mrf.mxu0
        %v556 = vadd.f32 %v477, %v555
        %v557 = vpop.f32.mrf.mxu0
        %558 = vmatprep.mubr.f32.mxu0 0.0
        %559 = vmatmul.mubr.f32.gmra.mxu0 %v438
        %v560 = vpop.f32.mrf.mxu0
        %v561 = vadd.f32 %v477, %v560
        %v562 = vpop.f32.mrf.mxu0
        %563 = vmatprep.mubr.f32.mxu0 0.0
        %564 = vmatmul.mubr.f32.gmra.mxu0 %v439
        %v565 = vpop.f32.mrf.mxu0
        %v566 = vadd.f32 %v477, %v565
        %v567 = vpop.f32.mrf.mxu0
        %568 = vmatprep.mubr.f32.mxu0 0.0
        %569 = vmatmul.mubr.f32.gmra.mxu0 %v440
        %v570 = vpop.f32.mrf.mxu0
        %v571 = vadd.f32 %v477, %v570
        %v572 = vpop.f32.mrf.mxu0
        %573 = vmatprep.mubr.f32.mxu0 0.0
        %574 = vmatmul.mubr.f32.gmra.mxu0 %v441
        %v575 = vpop.f32.mrf.mxu0
        %v576 = vadd.f32 %v477, %v575
        %v577 = vpop.f32.mrf.mxu0
        %578 = vmatprep.mubr.f32.mxu0 0.0
        %579 = vmatmul.mubr.f32.gmra.mxu0 %v442
        %v580 = vpop.f32.mrf.mxu0
        %v581 = vadd.f32 %v477, %v580
        %v582 = vpop.f32.mrf.mxu0
        %583 = vmatprep.mubr.f32.mxu0 0.0
        %584 = vmatmul.mubr.f32.gmra.mxu0 %v443
        %v585 = vpop.f32.mrf.mxu0
        %v586 = vadd.f32 %v477, %v585
        %v587 = vpop.f32.mrf.mxu0
        %588 = vmatprep.mubr.f32.mxu0 0.0
        %589 = vmatmul.mubr.f32.gmra.mxu0 %v444
        %v590 = vpop.f32.mrf.mxu0
        %v591 = vadd.f32 %v477, %v590
        %v592 = vpop.f32.mrf.mxu0
        %593 = vmatprep.mubr.f32.mxu0 0.0
        %594 = vmatmul.mubr.f32.gmra.mxu0 %v445
        %v595 = vpop.f32.mrf.mxu0
        %v596 = vadd.f32 %v477, %v595
        %v597 = vpop.f32.mrf.mxu0
        %598 = vmatprep.mubr.f32.mxu0 0.0
        %599 = vmatmul.mubr.f32.gmra.mxu0 %v446
        %v600 = vpop.f32.mrf.mxu0
        %v601 = vadd.f32 %v477, %v600
        %v602 = vpop.f32.mrf.mxu0
        %603 = vmatprep.mubr.f32.mxu0 0.0
        %604 = vmatmul.mubr.f32.gmra.mxu0 %v447
        %v605 = vpop.f32.mrf.mxu0
        %v606 = vadd.f32 %v477, %v605
        %v607 = vpop.f32.mrf.mxu0
        %608 = vmatprep.mubr.f32.mxu0 0.0
        %609 = vmatmul.mubr.f32.gmra.mxu0 %v448
        %v610 = vpop.f32.mrf.mxu0
        %v611 = vadd.f32 %v477, %v610
        %v612 = vpop.f32.mrf.mxu0
        %613 = vmatprep.mubr.f32.mxu0 0.0
        %614 = vmatmul.mubr.f32.gmra.mxu0 %v449
        %v615 = vpop.f32.mrf.mxu0
        %v616 = vadd.f32 %v477, %v615
        %v617 = vpop.f32.mrf.mxu0
        %618 = vmatprep.mubr.f32.mxu0 0.0
        %619 = vmatmul.mubr.f32.gmra.mxu0 %v450
        %v620 = vpop.f32.mrf.mxu0
        %v621 = vadd.f32 %v477, %v620
        %v622 = vpop.f32.mrf.mxu0
        %623 = vmatprep.mubr.f32.mxu0 0.0
        %624 = vmatmul.mubr.f32.gmra.mxu0 %v451
        %v625 = vpop.f32.mrf.mxu0
        %v626 = vadd.f32 %v477, %v625
        %v627 = vpop.f32.mrf.mxu0
        %628 = vmatprep.mubr.f32.mxu0 0.0
        %629 = vmatmul.mubr.f32.gmra.mxu0 %v452
        %v630 = vpop.f32.mrf.mxu0
        %v631 = vadd.f32 %v477, %v630
        %v632 = vpop.f32.mrf.mxu0
        %633 = vmatprep.mubr.f32.mxu0 0.0
        %634 = vmatmul.mubr.f32.gmra.mxu0 %v453
        %v635 = vpop.f32.mrf.mxu0
        %v636 = vadd.f32 %v477, %v635
        %v637 = vpop.f32.mrf.mxu0
        %638 = vdwg.mxu0
        %v639 = vmax.f32 %v546, 0.0
        %v640 = vmax.f32 %v551, 0.0
        %v641 = vmax.f32 %v556, 0.0
        %v642 = vmax.f32 %v561, 0.0
        %v643 = vmax.f32 %v566, 0.0
        %v644 = vmax.f32 %v571, 0.0
        %v645 = vmax.f32 %v576, 0.0
        %v646 = vmax.f32 %v581, 0.0
        %v647 = vmax.f32 %v586, 0.0
        %v648 = vmax.f32 %v591, 0.0
        %v649 = vmax.f32 %v596, 0.0
        %v650 = vmax.f32 %v601, 0.0
        %v651 = vmax.f32 %v606, 0.0
        %v652 = vmax.f32 %v611, 0.0
        %v653 = vmax.f32 %v616, 0.0
        %v654 = vmax.f32 %v621, 0.0
        %v655 = vmax.f32 %v626, 0.0
        %v656 = vmax.f32 %v631, 0.0
        %v657 = vmax.f32 %v636, 0.0
        %s658 = scalar_lea.vmem [#allocation2], 256
        %v659 = vld [vmem:[%s658] sm:$0xff]
        %v660 = vld [vmem:[%s658 + $0x8] sm:$0xff]
        %v661 = vld [vmem:[%s658 + $0x10] sm:$0xff]
        %v662 = vld [vmem:[%s658 + $0x18] sm:$0xff]
        %v663 = vld [vmem:[%s658 + $0x20] sm:$0xff]
        %v664 = vld [vmem:[%s658 + $0x28] sm:$0xff]
        %v665 = vld [vmem:[%s658 + $0x30] sm:$0xff]
        %v666 = vld [vmem:[%s658 + $0x38] sm:$0xff]
        %v667 = vld [vmem:[%s658 + $0x40] sm:$0xff]
        %v668 = vld [vmem:[%s658 + $0x48] sm:$0xff]
        %v669 = vld [vmem:[%s658 + $0x50] sm:$0xff]
        %v670 = vld [vmem:[%s658 + $0x58] sm:$0xff]
        %v671 = vld [vmem:[%s658 + $0x60] sm:$0xff]
        %v672 = vld [vmem:[%s658 + $0x68] sm:$0xff]
        %v673 = vld [vmem:[%s658 + $0x70] sm:$0xff]
        %v674 = vld [vmem:[%s658 + $0x78] sm:$0xff]
        %s675 = scalar_lea.vmem %s2, 2
        %v676 = vld [vmem:[%s675] sm:$0x1]
        %v678 = vlaneseq
        %v679 = vshrl.u32 %v678, 7
        %v680 = vsub.s32 0, %v679
        %v681 = vrot.slane %v676, %v680
        %683 = vmatprep.subr.mxu0 0.0
        %684 = vmatpush1.msra.mxu0 %v674
        %685 = vmatprep.subr.mxu0 0.0
        %686 = vmatpush1.msra.mxu0 %v673
        %687 = vmatprep.subr.mxu0 0.0
        %688 = vmatpush1.msra.mxu0 %v672
        %689 = vmatprep.subr.mxu0 0.0
        %690 = vmatpush1.msra.mxu0 %v671
        %691 = vmatprep.subr.mxu0 0.0
        %692 = vmatpush1.msra.mxu0 %v670
        %693 = vmatprep.subr.mxu0 0.0
        %694 = vmatpush1.msra.mxu0 %v669
        %695 = vmatprep.subr.mxu0 0.0
        %696 = vmatpush1.msra.mxu0 %v668
        %697 = vmatprep.subr.mxu0 0.0
        %698 = vmatpush1.msra.mxu0 %v667
        %699 = vmatprep.subr.mxu0 0.0
        %700 = vmatpush1.msra.mxu0 %v666
        %701 = vmatprep.subr.mxu0 0.0
        %702 = vmatpush1.msra.mxu0 %v665
        %703 = vmatprep.subr.mxu0 0.0
        %704 = vmatpush1.msra.mxu0 %v664
        %705 = vmatprep.subr.mxu0 0.0
        %706 = vmatpush1.msra.mxu0 %v663
        %707 = vmatprep.subr.mxu0 0.0
        %708 = vmatpush1.msra.mxu0 %v662
        %709 = vmatprep.subr.mxu0 0.0
        %710 = vmatpush1.msra.mxu0 %v661
        %711 = vmatprep.subr.mxu0 0.0
        %712 = vmatpush1.msra.mxu0 %v660
        %713 = vmatprep.subr.mxu0 0.0
        %714 = vmatpush1.msra.mxu0 %v659
        %715 = vmatprep.subr.mxu0 0.0
        %716 = vmatpush2.msra.mxu0 0.0
        %717 = vmatprep.subr.mxu0 0.0
        %718 = vmatpush2.msra.mxu0 0.0
        %719 = vmatprep.subr.mxu0 0.0
        %720 = vmatpush2.msra.mxu0 0.0
        %721 = vmatprep.subr.mxu0 0.0
        %722 = vmatpush2.msra.mxu0 0.0
        %723 = vmatprep.subr.mxu0 0.0
        %724 = vmatpush2.msra.mxu0 0.0
        %725 = vmatprep.subr.mxu0 0.0
        %726 = vmatpush2.msra.mxu0 0.0
        %727 = vmatprep.subr.mxu0 0.0
        %728 = vmatpush2.msra.mxu0 0.0
        %729 = vmatprep.subr.mxu0 0.0
        %730 = vmatpush2.msra.mxu0 0.0
        %731 = vmatprep.subr.mxu0 0.0
        %732 = vmatpush2.msra.mxu0 0.0
        %733 = vmatprep.subr.mxu0 0.0
        %734 = vmatpush2.msra.mxu0 0.0
        %735 = vmatprep.subr.mxu0 0.0
        %736 = vmatpush2.msra.mxu0 0.0
        %737 = vmatprep.subr.mxu0 0.0
        %738 = vmatpush2.msra.mxu0 0.0
        %739 = vmatprep.subr.mxu0 0.0
        %740 = vmatpush2.msra.mxu0 0.0
        %741 = vmatprep.subr.mxu0 0.0
        %742 = vmatpush2.msra.mxu0 0.0
        %743 = vmatprep.subr.mxu0 0.0
        %744 = vmatpush2.msra.mxu0 0.0
        %745 = vmatprep.subr.mxu0 0.0
        %746 = vmatpush2.msra.mxu0 0.0
        %747 = vmatprep.mubr.f32.mxu0 0.0
        %748 = vmatmul.mubr.f32.gmra.mxu0 %v639
        %v749 = vpop.f32.mrf.mxu0
        %v750 = vadd.f32 %v681, %v749
        %v751 = vpop.f32.mrf.mxu0
        %752 = vmatprep.mubr.f32.mxu0 0.0
        %753 = vmatmul.mubr.f32.gmra.mxu0 %v640
        %v754 = vpop.f32.mrf.mxu0
        %v755 = vadd.f32 %v681, %v754
        %v756 = vpop.f32.mrf.mxu0
        %757 = vmatprep.mubr.f32.mxu0 0.0
        %758 = vmatmul.mubr.f32.gmra.mxu0 %v641
        %v759 = vpop.f32.mrf.mxu0
        %v760 = vadd.f32 %v681, %v759
        %v761 = vpop.f32.mrf.mxu0
        %762 = vmatprep.mubr.f32.mxu0 0.0
        %763 = vmatmul.mubr.f32.gmra.mxu0 %v642
        %v764 = vpop.f32.mrf.mxu0
        %v765 = vadd.f32 %v681, %v764
        %v766 = vpop.f32.mrf.mxu0
        %767 = vmatprep.mubr.f32.mxu0 0.0
        %768 = vmatmul.mubr.f32.gmra.mxu0 %v643
        %v769 = vpop.f32.mrf.mxu0
        %v770 = vadd.f32 %v681, %v769
        %v771 = vpop.f32.mrf.mxu0
        %772 = vmatprep.mubr.f32.mxu0 0.0
        %773 = vmatmul.mubr.f32.gmra.mxu0 %v644
        %v774 = vpop.f32.mrf.mxu0
        %v775 = vadd.f32 %v681, %v774
        %v776 = vpop.f32.mrf.mxu0
        %777 = vmatprep.mubr.f32.mxu0 0.0
        %778 = vmatmul.mubr.f32.gmra.mxu0 %v645
        %v779 = vpop.f32.mrf.mxu0
        %v780 = vadd.f32 %v681, %v779
        %v781 = vpop.f32.mrf.mxu0
        %782 = vmatprep.mubr.f32.mxu0 0.0
        %783 = vmatmul.mubr.f32.gmra.mxu0 %v646
        %v784 = vpop.f32.mrf.mxu0
        %v785 = vadd.f32 %v681, %v784
        %v786 = vpop.f32.mrf.mxu0
        %787 = vmatprep.mubr.f32.mxu0 0.0
        %788 = vmatmul.mubr.f32.gmra.mxu0 %v647
        %v789 = vpop.f32.mrf.mxu0
        %v790 = vadd.f32 %v681, %v789
        %v791 = vpop.f32.mrf.mxu0
        %792 = vmatprep.mubr.f32.mxu0 0.0
        %793 = vmatmul.mubr.f32.gmra.mxu0 %v648
        %v794 = vpop.f32.mrf.mxu0
        %v795 = vadd.f32 %v681, %v794
        %v796 = vpop.f32.mrf.mxu0
        %797 = vmatprep.mubr.f32.mxu0 0.0
        %798 = vmatmul.mubr.f32.gmra.mxu0 %v649
        %v799 = vpop.f32.mrf.mxu0
        %v800 = vadd.f32 %v681, %v799
        %v801 = vpop.f32.mrf.mxu0
        %802 = vmatprep.mubr.f32.mxu0 0.0
        %803 = vmatmul.mubr.f32.gmra.mxu0 %v650
        %v804 = vpop.f32.mrf.mxu0
        %v805 = vadd.f32 %v681, %v804
        %v806 = vpop.f32.mrf.mxu0
        %807 = vmatprep.mubr.f32.mxu0 0.0
        %808 = vmatmul.mubr.f32.gmra.mxu0 %v651
        %v809 = vpop.f32.mrf.mxu0
        %v810 = vadd.f32 %v681, %v809
        %v811 = vpop.f32.mrf.mxu0
        %812 = vmatprep.mubr.f32.mxu0 0.0
        %813 = vmatmul.mubr.f32.gmra.mxu0 %v652
        %v814 = vpop.f32.mrf.mxu0
        %v815 = vadd.f32 %v681, %v814
        %v816 = vpop.f32.mrf.mxu0
        %817 = vmatprep.mubr.f32.mxu0 0.0
        %818 = vmatmul.mubr.f32.gmra.mxu0 %v653
        %v819 = vpop.f32.mrf.mxu0
        %v820 = vadd.f32 %v681, %v819
        %v821 = vpop.f32.mrf.mxu0
        %822 = vmatprep.mubr.f32.mxu0 0.0
        %823 = vmatmul.mubr.f32.gmra.mxu0 %v654
        %v824 = vpop.f32.mrf.mxu0
        %v825 = vadd.f32 %v681, %v824
        %v826 = vpop.f32.mrf.mxu0
        %827 = vmatprep.mubr.f32.mxu0 0.0
        %828 = vmatmul.mubr.f32.gmra.mxu0 %v655
        %v829 = vpop.f32.mrf.mxu0
        %v830 = vadd.f32 %v681, %v829
        %v831 = vpop.f32.mrf.mxu0
        %832 = vmatprep.mubr.f32.mxu0 0.0
        %833 = vmatmul.mubr.f32.gmra.mxu0 %v656
        %v834 = vpop.f32.mrf.mxu0
        %v835 = vadd.f32 %v681, %v834
        %v836 = vpop.f32.mrf.mxu0
        %837 = vmatprep.mubr.f32.mxu0 0.0
        %838 = vmatmul.mubr.f32.gmra.mxu0 %v657
        %v839 = vpop.f32.mrf.mxu0
        %v840 = vadd.f32 %v681, %v839
        %v841 = vpop.f32.mrf.mxu0
        %842 = vdwg.mxu0
        %843 = vst [vmem:[%s187] sm:$0xff] %v750
        %844 = vst [vmem:[%s187 + $0x8] sm:$0xff] %v755
        %845 = vst [vmem:[%s187 + $0x10] sm:$0xff] %v760
        %846 = vst [vmem:[%s187 + $0x18] sm:$0xff] %v765
        %847 = vst [vmem:[%s187 + $0x20] sm:$0xff] %v770
        %848 = vst [vmem:[%s187 + $0x28] sm:$0xff] %v775
        %849 = vst [vmem:[%s187 + $0x30] sm:$0xff] %v780
        %850 = vst [vmem:[%s187 + $0x38] sm:$0xff] %v785
        %851 = vst [vmem:[%s187 + $0x40] sm:$0xff] %v790
        %852 = vst [vmem:[%s187 + $0x48] sm:$0xff] %v795
        %853 = vst [vmem:[%s187 + $0x50] sm:$0xff] %v800
        %854 = vst [vmem:[%s187 + $0x58] sm:$0xff] %v805
        %855 = vst [vmem:[%s187 + $0x60] sm:$0xff] %v810
        %856 = vst [vmem:[%s187 + $0x68] sm:$0xff] %v815
        %857 = vst [vmem:[%s187 + $0x70] sm:$0xff] %v820
        %858 = vst [vmem:[%s187 + $0x78] sm:$0xff] %v825
        %859 = vst [vmem:[%s187 + $0x80] sm:$0xff] %v830
        %860 = vst [vmem:[%s187 + $0x88] sm:$0xff] %v835
        %861 = vst [vmem:[%s187 + $0x90] sm:$0xff] %v840
        %s862 = smul.u32 19, %s15
        %p863 = scmp.lt.s32.totalorder %s862, 37
        %s864 = scalar_select %p863, %s862, 37
        %s865 = smul.addr %s864, 8
        %s866 = scalar_lea.vmem %s3, %s865
        // Predicated region
        $region37: #{lazy_mlp_forward.1} parent=31 // pred_check
          %p867 = pneg %p101
        $region38: #{lazy_mlp_forward.1} parent=31 // pred_check_branch
          %869 = sbr.rel (%p867) target = $region40
        $region39: #{lazy_mlp_forward.1} parent=31 // pred_region
          %s870 = smul.u32 19, %s15
        $region40: #{lazy_mlp_forward.1} parent=31 // pred_fallthru
          _
      $region32: #{lazy_mlp_forward.1} parent=5 // pred_fallthru
        _
      %p871 = scmp.le.s32.totalorder 2, %s10
      // Predicated region
      $region41: #{lazy_mlp_forward.1} parent=5 // pred_check
        %p872 = pneg %p871
      $region42: #{lazy_mlp_forward.1} parent=5 // pred_check_branch
        %874 = sbr.rel (%p872) target = $region44
      $region43: #{lazy_mlp_forward.1} parent=5 // pred_region
        %s875 = ssub.s32 %s10, 2
        // Predicated region
        $region45: #{lazy_mlp_forward.1} parent=43 // pred_check
          %p876 = pneg %p107
        $region46: #{lazy_mlp_forward.1} parent=43 // pred_check_branch
          %878 = sbr.rel (%p876) target = $region48
        $region47: #{lazy_mlp_forward.1} parent=43 // pred_region
          %s879 = smul.u32 19, %s16
          %p880 = scmp.lt.s32.totalorder %s879, 37
          %s881 = scalar_select %p880, %s879, 37
          %s882 = smul.addr %s881, 8
          %s883 = scalar_lea.vmem %s3, %s882
        $region48: #{lazy_mlp_forward.1} parent=43 // pred_fallthru
          _
      $region44: #{lazy_mlp_forward.1} parent=5 // pred_fallthru
        _
    $region6: #{lazy_mlp_forward.1} parent=1 // loop_footer
      %s14 = sadd.s32 1, %s10
    $region7: #{lazy_mlp_forward.1} parent=1 // loop_footer_branch
      %9 = sbr.rel target = $region3
    $region8: #{lazy_mlp_forward.1} parent=1 // loop_exit
      _
    %884 = vsyncpa [#allocation3], 1
    %s885 = scalar_lea.sflag [#allocation3], 1
    %886 = vsyncpa %s885, 1

</llo_original>
